<compile_context>
chip_gen: v6e
topology: v6e:2x2x1
jax: 0.10.0
libtpu: 0.0.40
codegen_flags: <defaults>
</compile_context>

<pallas_src>
import numpy as np
import jax
import jax.numpy as jnp
from jax import lax
from jax.experimental import pallas as pl
from jax.experimental.pallas import tpu as pltpu


# ---------------------------------------------------------------- host helpers
def _pool_matrix_1d(L, p):
    """(p, L) matrix performing 1-D average pooling with the module's k/stride."""
    s = L // p
    k = L - s * (p - 1)
    M = np.zeros((p, L), np.float32)
    for a in range(p):
        M[a, a * s:a * s + k] = 1.0 / k
    return M


def _interp_matrix_1d(L, p):
    """(L, p) matrix performing 1-D bilinear upsampling p -> L, align_corners=True."""
    M = np.zeros((L, p), np.float32)
    if p == 1:
        M[:, 0] = 1.0
        return M
    for j in range(L):
        src = j * (p - 1) / (L - 1)
        i0 = min(int(np.floor(src)), p - 2)
        frac = src - i0
        M[j, i0] += 1.0 - frac
        M[j, i0 + 1] += frac
    return M


def _build_packed_matrices(H, W, pool_sizes, pq_pad):
    """Packed separable pool / upsample Kronecker matrices.

    All paths' pooled bins share ONE column axis of size pq_pad (>= sum p*p):
      poolk: (H*W, pq_pad)   x(C,HW) @ poolk -> packed pooled bins, all paths
      upk:   (pq_pad, H*W)   masked_act(P*O, pq_pad) @ upk -> (P*O, HW)
    Padded / foreign columns are exact zeros; correctness of the stacked conv
    relies on the per-path column mask applied in the kernel.
    """
    HW = H * W
    offs = np.cumsum([0] + [p * p for p in pool_sizes])
    poolk = np.zeros((HW, pq_pad), np.float32)
    upk = np.zeros((pq_pad, HW), np.float32)
    for i, p in enumerate(pool_sizes):
        Pr = _pool_matrix_1d(H, p)      # (p, H)
        Pc = _pool_matrix_1d(W, p)      # (p, W)
        Ur = _interp_matrix_1d(H, p)    # (H, p)
        Uc = _interp_matrix_1d(W, p)    # (W, p)
        c0, c1 = int(offs[i]), int(offs[i + 1])
        poolk[:, c0:c1] = np.kron(Pr, Pc).T      # [h*W+w, a*p+b] = Pr[a,h]*Pc[b,w]
        upk[c0:c1, :] = np.kron(Ur, Uc).T        # [a*p+b, h*W+w] = Ur[h,a]*Uc[w,b]
    return poolk, upk, offs


# ---------------------------------------------------------------- Pallas kernels
def _pool_kernel(x_ref, poolk_ref, pooled_ref):
    # x_ref:      (1, C, HWT)  one HW tile of one batch element (lane-dense)
    # poolk_ref:  (HWT, PQ)    packed pool Kronecker matrix tile (compute dtype)
    # pooled_ref: (1, C, PQ)   f32 accumulator, resident across the HW-tile axis
    @pl.when(pl.program_id(1) == 0)
    def _init():
        pooled_ref[...] = jnp.zeros_like(pooled_ref)

    xt = x_ref[0].astype(poolk_ref.dtype)                           # (C, HWT)
    pooled_ref[0, :, :] = pooled_ref[0, :, :] + jnp.dot(
        xt, poolk_ref[...], preferred_element_type=jnp.float32)     # (C, PQ)


def _cbr_upsample_kernel(x_ref, pooled_ref, w_ref, shift_ref, mask_ref, upk_ref,
                         o_ref):
    # x_ref:      (1, C, HWT)    input tile -> identity slice of the concat
    # pooled_ref: (1, C, PQ)     packed pooled bins (f32), all paths
    # w_ref:      (P*O, C)       stacked 1x1 conv weights, BN scale folded in
    # shift_ref:  (P*O, 1)       folded BN shift (beta - mean*scale), f32
    # mask_ref:   (P*O, PQ)      per-path pooled-column mask (zeroes cross-path cols)
    # upk_ref:    (PQ, HWT)      packed upsample Kronecker matrix tile
    # o_ref:      (1, C+P*O, HWT) concat output tile
    C = x_ref.shape[1]

    # identity slice of the concat (lane-dense store)
    o_ref[0, 0:C, :] = x_ref[0]

    # stacked 1x1 conv + folded BatchNorm + ReLU, then per-path column mask.
    # (recomputed per HW tile: tiny (P*O,C)@(C,128) matmul, hidden under DMA)
    z = jnp.dot(w_ref[...], pooled_ref[0].astype(w_ref.dtype),
                preferred_element_type=jnp.float32)                 # (P*O, PQ)
    act = jnp.maximum(z + shift_ref[...], 0.0) * mask_ref[...]

    # block-structured bilinear upsample (align_corners=True) for this HW tile
    up = jnp.dot(act.astype(upk_ref.dtype), upk_ref[...],
                 preferred_element_type=jnp.float32)                # (P*O, HWT)
    o_ref[0, C:, :] = up.astype(o_ref.dtype)


# ---------------------------------------------------------------- module glue
def _compiler_params(dims, vmem_limit_bytes):
    if vmem_limit_bytes is None:
        return pltpu.CompilerParams(dimension_semantics=dims)
    return pltpu.CompilerParams(dimension_semantics=dims,
                                vmem_limit_bytes=vmem_limit_bytes)


def _pick_hw_tile(HW, requested):
    if requested is not None and HW % requested == 0 and \
            (requested % 128 == 0 or requested == HW):
        return requested
    if HW % 128 != 0:
        return HW
    for t in (2048, 1024, 512, 256, 128):
        if t <= HW and HW % t == 0:
            return t
    return HW


def make_pyramid_pooling(params, pool_sizes, H, W, *,
                         compute_dtype=jnp.float32, hw_tile=None,
                         vmem_limit_bytes=None):
    """Build the fused forward fn once per (H, W, pool_sizes, params)."""
    n_paths = len(pool_sizes)
    HW = H * W
    pq_total = sum(p * p for p in pool_sizes)
    PQ = max(128, ((pq_total + 127) // 128) * 128)   # lane-aligned packed axis

    poolk_np, upk_np, offs = _build_packed_matrices(H, W, pool_sizes, PQ)
    poolk = jnp.asarray(poolk_np).astype(compute_dtype)       # (HW, PQ)
    upk = jnp.asarray(upk_np).astype(compute_dtype)           # (PQ, HW)

    w_stack = jnp.concatenate([w for w, _ in params], axis=0).astype(compute_dtype)
    shift = jnp.concatenate([s for _, s in params], axis=0)[:, None].astype(jnp.float32)
    O, C = params[0][0].shape
    out_c = C + n_paths * O

    mask_np = np.zeros((n_paths * O, PQ), np.float32)
    for i in range(n_paths):
        mask_np[i * O:(i + 1) * O, int(offs[i]):int(offs[i + 1])] = 1.0
    mask = jnp.asarray(mask_np)

    hwt = _pick_hw_tile(HW, hw_tile)
    n_tiles = HW // hwt

    def forward(x):
        N = x.shape[0]
        x2 = x.reshape(N, C, HW)                               # lane-dense kernel I/O

        # Pass 1: packed average pooling for all paths, accumulated over HW tiles.
        pooled = pl.pallas_call(
            _pool_kernel,
            out_shape=jax.ShapeDtypeStruct((N, C, PQ), jnp.float32),
            grid=(N, n_tiles),
            in_specs=[
                pl.BlockSpec((1, C, hwt), lambda n, t: (n, 0, t)),
                pl.BlockSpec((hwt, PQ), lambda n, t: (t, 0)),
            ],
            out_specs=pl.BlockSpec((1, C, PQ), lambda n, t: (n, 0, 0)),
            compiler_params=_compiler_params(("parallel", "arbitrary"),
                                             vmem_limit_bytes),
        )(x2, poolk)

        # Pass 2: stacked 1x1 conv (BN folded) + ReLU + packed bilinear upsample
        # + identity concat slice, streamed over HW tiles of the output.
        out = pl.pallas_call(
            _cbr_upsample_kernel,
            out_shape=jax.ShapeDtypeStruct((N, out_c, HW), x.dtype),
            grid=(N, n_tiles),
            in_specs=[
                pl.BlockSpec((1, C, hwt), lambda n, t: (n, 0, t)),
                pl.BlockSpec((1, C, PQ), lambda n, t: (n, 0, 0)),
                pl.BlockSpec((n_paths * O, C), lambda n, t: (0, 0)),
                pl.BlockSpec((n_paths * O, 1), lambda n, t: (0, 0)),
                pl.BlockSpec((n_paths * O, PQ), lambda n, t: (0, 0)),
                pl.BlockSpec((PQ, hwt), lambda n, t: (0, t)),
            ],
            out_specs=pl.BlockSpec((1, out_c, hwt), lambda n, t: (n, 0, t)),
            compiler_params=_compiler_params(("parallel", "parallel"),
                                             vmem_limit_bytes),
        )(x2, pooled, w_stack, shift, mask, upk)
        return out.reshape(N, out_c, H, W)

    return jax.jit(forward)


def init_params(key, in_channels, pool_sizes, eps=1e-5):
    # conv bias=False (is_batchnorm=True).  BatchNorm applied in inference form
    # and folded into the 1x1 conv as scale/shift.
    out_c = in_channels // len(pool_sizes)
    params = []
    for i in range(len(pool_sizes)):
        k = jax.random.fold_in(key, i)
        kw_, kg, kb, km, kv = jax.random.split(k, 5)
        w = jax.random.normal(kw_, (out_c, in_channels), jnp.float32) * 0.5
        gamma = jax.random.uniform(kg, (out_c,), jnp.float32, 0.5, 1.5)
        beta = jax.random.normal(kb, (out_c,), jnp.float32) * 0.1
        mean = jax.random.normal(km, (out_c,), jnp.float32) * 0.1
        var = jax.random.uniform(kv, (out_c,), jnp.float32, 0.5, 1.5)
        scale = gamma / jnp.sqrt(var + eps)
        params.append((w * scale[:, None], beta - mean * scale))
    return params


# ---------------------------------------------------------------- pure-JAX ref
def reference_forward(x, params, pool_sizes):
    N, C, H, W = x.shape
    outs = [x]
    for i, p in enumerate(pool_sizes):
        sh, sw = H // p, W // p
        kh, kw = H - sh * (p - 1), W - sw * (p - 1)
        pooled = lax.reduce_window(x, 0.0, lax.add,
                                   (1, 1, kh, kw), (1, 1, sh, sw), 'VALID') / (kh * kw)
        w_scaled, shift = params[i]
        z = jnp.einsum('oc,ncpq->nopq', w_scaled, pooled) + shift[None, :, None, None]
        a = jnp.maximum(z, 0.0)
        ur = jnp.asarray(_interp_matrix_1d(H, p))
        uc = jnp.asarray(_interp_matrix_1d(W, p))
        outs.append(jnp.einsum('hp,nopq,wq->nohw', ur, a, uc))
    return jnp.concatenate(outs, axis=1)


if __name__ == "__main__":
    key = jax.random.PRNGKey(0)
    kx, kp = jax.random.split(key)
    N, C, H, W = 2, 4, 16, 16
    pool_sizes = [6, 3, 2, 1]

    x = jax.random.normal(kx, (N, C, H, W), jnp.float32)
    params = init_params(kp, C, pool_sizes)
    ref = reference_forward(x, params, pool_sizes)

    # f32 path: strict check against the pure-JAX reference (hw_tile=128 so the
    # multi-tile pooling accumulation and tiled upsample paths are exercised).
    fwd32 = make_pyramid_pooling(params, pool_sizes, H, W,
                                 compute_dtype=jnp.float32, hw_tile=128)
    out32 = jax.block_until_ready(fwd32(x))
    assert out32.shape == (N, 2 * C, H, W), out32.shape
    if not jnp.allclose(out32, ref, atol=1e-4, rtol=1e-4):
        raise AssertionError("f32 mismatch vs reference, max err %e"
                             % float(jnp.max(jnp.abs(out32 - ref))))

    # bf16-operand / f32-accumulate path (MXU-native on v6e/v7x): loose check.
    fwd16 = make_pyramid_pooling(params, pool_sizes, H, W,
                                 compute_dtype=jnp.bfloat16, hw_tile=128)
    out16 = jax.block_until_ready(fwd16(x))
    assert out16.shape == (N, 2 * C, H, W), out16.shape
    if not jnp.allclose(out16, ref, atol=5e-2, rtol=5e-2):
        raise AssertionError("bf16 mismatch vs reference, max err %e"
                             % float(jnp.max(jnp.abs(out16 - ref))))

    print("KERNEL_OK")
</pallas_src>

<mosaic_0001>
module attributes {stable_mosaic.version = 11 : i64} {
  func.func @_cbr_upsample_kernel(%arg0: i32, %arg1: i32, %arg2: memref<1x4x128xf32, #tpu.memory_space<vmem>>, %arg3: memref<1x4x128xf32, #tpu.memory_space<vmem>>, %arg4: memref<4x4xf32, #tpu.memory_space<vmem>>, %arg5: memref<4x1xf32, #tpu.memory_space<vmem>>, %arg6: memref<4x128xf32, #tpu.memory_space<vmem>>, %arg7: memref<128x128xf32, #tpu.memory_space<vmem>>, %arg8: memref<1x8x128xf32, #tpu.memory_space<vmem>>) attributes {dimension_semantics = [#tpu.dimension_semantics<parallel>, #tpu.dimension_semantics<parallel>], iteration_bounds = array<i64: 2, 2>, scalar_prefetch = 0 : i64, scratch_operands = 0 : i64, tpu.core_type = #tpu.core_type<tc>, window_params = [{transform_indices = @transform_0, window_bounds = array<i64: 1, 4, 128>}, {transform_indices = @transform_1, window_bounds = array<i64: 1, 4, 128>}, {pipeline_mode = #tpu.pipeline_mode<synchronous>, transform_indices = @transform_2, window_bounds = array<i64: 4, 4>}, {pipeline_mode = #tpu.pipeline_mode<synchronous>, transform_indices = @transform_3, window_bounds = array<i64: 4, 1>}, {pipeline_mode = #tpu.pipeline_mode<synchronous>, transform_indices = @transform_4, window_bounds = array<i64: 4, 128>}, {transform_indices = @transform_5, window_bounds = array<i64: 128, 128>}, {transform_indices = @transform_6, window_bounds = array<i64: 1, 8, 128>}]} {
    %c0 = arith.constant 0 : index
    %c0_0 = arith.constant 0 : index
    %c0_1 = arith.constant 0 : index
    %0 = vector.load %arg2[%c0, %c0_0, %c0_1] : memref<1x4x128xf32, #tpu.memory_space<vmem>>, vector<1x4x128xf32>
    %1 = vector.shape_cast %0 : vector<1x4x128xf32> to vector<4x128xf32>
    %c0_2 = arith.constant 0 : index
    %c0_3 = arith.constant 0 : index
    %c0_4 = arith.constant 0 : index
    %2 = vector.load %arg8[%c0_2, %c0_3, %c0_4] : memref<1x8x128xf32, #tpu.memory_space<vmem>>, vector<1x4x128xf32>
    %3 = vector.shape_cast %2 : vector<1x4x128xf32> to vector<4x128xf32>
    %4 = vector.shape_cast %1 : vector<4x128xf32> to vector<1x4x128xf32>
    tpu.vector_store %arg8[%c0_2, %c0_3, %c0_4], %4 {strides = array<i32>} : memref<1x8x128xf32, #tpu.memory_space<vmem>>, vector<1x4x128xf32>,
    %c0_5 = arith.constant 0 : index
    %c0_6 = arith.constant 0 : index
    %5 = vector.load %arg4[%c0_5, %c0_6] : memref<4x4xf32, #tpu.memory_space<vmem>>, vector<4x4xf32>
    %c0_7 = arith.constant 0 : index
    %c0_8 = arith.constant 0 : index
    %c0_9 = arith.constant 0 : index
    %6 = vector.load %arg3[%c0_7, %c0_8, %c0_9] : memref<1x4x128xf32, #tpu.memory_space<vmem>>, vector<1x4x128xf32>
    %7 = vector.shape_cast %6 : vector<1x4x128xf32> to vector<4x128xf32>
    %cst = arith.constant dense<0.000000e+00> : vector<4x128xf32>
    %8 = tpu.matmul %5, %7, %cst {dimension_numbers = #tpu.dot_dimension_numbers<[1], [0], [0], [1], [0, 0, 1, 1], [], []>} : vector<4x4xf32>, vector<4x128xf32>, vector<4x128xf32> -> vector<4x128xf32>
    %c0_10 = arith.constant 0 : index
    %c0_11 = arith.constant 0 : index
    %9 = vector.load %arg5[%c0_10, %c0_11] : memref<4x1xf32, #tpu.memory_space<vmem>>, vector<4x1xf32>
    %10 = vector.broadcast %9 : vector<4x1xf32> to vector<4x128xf32>
    %11 = arith.addf %8, %10 : vector<4x128xf32>
    %cst_12 = arith.constant 0.000000e+00 : f32
    %12 = vector.broadcast %cst_12 : f32 to vector<4x128xf32>
    %13 = arith.maximumf %11, %12 : vector<4x128xf32>
    %c0_13 = arith.constant 0 : index
    %c0_14 = arith.constant 0 : index
    %14 = vector.load %arg6[%c0_13, %c0_14] : memref<4x128xf32, #tpu.memory_space<vmem>>, vector<4x128xf32>
    %15 = arith.mulf %13, %14 : vector<4x128xf32>
    %c0_15 = arith.constant 0 : index
    %c0_16 = arith.constant 0 : index
    %16 = vector.load %arg7[%c0_15, %c0_16] : memref<128x128xf32, #tpu.memory_space<vmem>>, vector<128x128xf32>
    %cst_17 = arith.constant dense<0.000000e+00> : vector<4x128xf32>
    %17 = tpu.matmul %15, %16, %cst_17 {dimension_numbers = #tpu.dot_dimension_numbers<[1], [0], [0], [1], [0, 0, 1, 1], [], []>} : vector<4x128xf32>, vector<128x128xf32>, vector<4x128xf32> -> vector<4x128xf32>
    %c0_18 = arith.constant 0 : index
    %c4 = arith.constant 4 : index
    %c0_19 = arith.constant 0 : index
    %18 = vector.load %arg8[%c0_18, %c4, %c0_19] : memref<1x8x128xf32, #tpu.memory_space<vmem>>, vector<1x4x128xf32>
    %19 = vector.shape_cast %18 : vector<1x4x128xf32> to vector<4x128xf32>
    %20 = vector.shape_cast %17 : vector<4x128xf32> to vector<1x4x128xf32>
    tpu.vector_store %arg8[%c0_18, %c4, %c0_19], %20 {strides = array<i32>} : memref<1x8x128xf32, #tpu.memory_space<vmem>>, vector<1x4x128xf32>,
    return
  }
  func.func @transform_0(%arg0: i32, %arg1: i32) -> (i32, i32, i32) {
    %c0_i32 = arith.constant 0 : i32
    %c0_i32_0 = arith.constant 0 : i32
    return %arg0, %c0_i32, %arg1 : i32, i32, i32
  }
  func.func @transform_1(%arg0: i32, %arg1: i32) -> (i32, i32, i32) {
    %c0_i32 = arith.constant 0 : i32
    %c0_i32_0 = arith.constant 0 : i32
    %c0_i32_1 = arith.constant 0 : i32
    return %arg0, %c0_i32, %c0_i32_0 : i32, i32, i32
  }
  func.func @transform_2(%arg0: i32, %arg1: i32) -> (i32, i32) {
    %c0_i32 = arith.constant 0 : i32
    %c0_i32_0 = arith.constant 0 : i32
    %c0_i32_1 = arith.constant 0 : i32
    return %c0_i32, %c0_i32_0 : i32, i32
  }
  func.func @transform_3(%arg0: i32, %arg1: i32) -> (i32, i32) {
    %c0_i32 = arith.constant 0 : i32
    %c0_i32_0 = arith.constant 0 : i32
    %c0_i32_1 = arith.constant 0 : i32
    return %c0_i32, %c0_i32_0 : i32, i32
  }
  func.func @transform_4(%arg0: i32, %arg1: i32) -> (i32, i32) {
    %c0_i32 = arith.constant 0 : i32
    %c0_i32_0 = arith.constant 0 : i32
    %c0_i32_1 = arith.constant 0 : i32
    return %c0_i32, %c0_i32_0 : i32, i32
  }
  func.func @transform_5(%arg0: i32, %arg1: i32) -> (i32, i32) {
    %c0_i32 = arith.constant 0 : i32
    %c0_i32_0 = arith.constant 0 : i32
    return %c0_i32, %arg1 : i32, i32
  }
  func.func @transform_6(%arg0: i32, %arg1: i32) -> (i32, i32, i32) {
    %c0_i32 = arith.constant 0 : i32
    %c0_i32_0 = arith.constant 0 : i32
    return %arg0, %c0_i32, %arg1 : i32, i32, i32
  }
}

module attributes {stable_mosaic.version = 11 : i64} {
  func.func @_pool_kernel(%arg0: i32, %arg1: i32, %arg2: memref<1x4x128xf32, #tpu.memory_space<vmem>>, %arg3: memref<128x128xf32, #tpu.memory_space<vmem>>, %arg4: memref<1x4x128xf32, #tpu.memory_space<vmem>>) attributes {dimension_semantics = [#tpu.dimension_semantics<parallel>, #tpu.dimension_semantics<arbitrary>], iteration_bounds = array<i64: 2, 2>, scalar_prefetch = 0 : i64, scratch_operands = 0 : i64, tpu.core_type = #tpu.core_type<tc>, window_params = [{transform_indices = @transform_0, window_bounds = array<i64: 1, 4, 128>}, {transform_indices = @transform_1, window_bounds = array<i64: 128, 128>}, {transform_indices = @transform_2, window_bounds = array<i64: 1, 4, 128>}]} {
    %c0_i32 = arith.constant 0 : i32
    %0 = arith.cmpi eq, %arg1, %c0_i32 : i32
    %1 = arith.extui %0 : i1 to i32
    %c0_i32_0 = arith.constant 0 : i32
    %2 = arith.cmpi ne, %1, %c0_i32_0 : i32
    scf.if %2 {
      %cst_11 = arith.constant 0.000000e+00 : f32
      %13 = vector.broadcast %cst_11 : f32 to vector<1x4x128xf32>
      %c0_12 = arith.constant 0 : index
      %c0_13 = arith.constant 0 : index
      %c0_14 = arith.constant 0 : index
      %14 = vector.load %arg4[%c0_12, %c0_13, %c0_14] : memref<1x4x128xf32, #tpu.memory_space<vmem>>, vector<1x4x128xf32>
      tpu.vector_store %arg4[%c0_12, %c0_13, %c0_14], %13 {strides = array<i32>} : memref<1x4x128xf32, #tpu.memory_space<vmem>>, vector<1x4x128xf32>,
    } else {
    }
    %c0 = arith.constant 0 : index
    %c0_1 = arith.constant 0 : index
    %c0_2 = arith.constant 0 : index
    %3 = vector.load %arg2[%c0, %c0_1, %c0_2] : memref<1x4x128xf32, #tpu.memory_space<vmem>>, vector<1x4x128xf32>
    %4 = vector.shape_cast %3 : vector<1x4x128xf32> to vector<4x128xf32>
    %c0_3 = arith.constant 0 : index
    %c0_4 = arith.constant 0 : index
    %c0_5 = arith.constant 0 : index
    %5 = vector.load %arg4[%c0_3, %c0_4, %c0_5] : memref<1x4x128xf32, #tpu.memory_space<vmem>>, vector<1x4x128xf32>
    %6 = vector.shape_cast %5 : vector<1x4x128xf32> to vector<4x128xf32>
    %c0_6 = arith.constant 0 : index
    %c0_7 = arith.constant 0 : index
    %7 = vector.load %arg3[%c0_6, %c0_7] : memref<128x128xf32, #tpu.memory_space<vmem>>, vector<128x128xf32>
    %cst = arith.constant dense<0.000000e+00> : vector<4x128xf32>
    %8 = tpu.matmul %4, %7, %cst {dimension_numbers = #tpu.dot_dimension_numbers<[1], [0], [0], [1], [0, 0, 1, 1], [], []>} : vector<4x128xf32>, vector<128x128xf32>, vector<4x128xf32> -> vector<4x128xf32>
    %9 = arith.addf %6, %8 : vector<4x128xf32>
    %c0_8 = arith.constant 0 : index
    %c0_9 = arith.constant 0 : index
    %c0_10 = arith.constant 0 : index
    %10 = vector.load %arg4[%c0_8, %c0_9, %c0_10] : memref<1x4x128xf32, #tpu.memory_space<vmem>>, vector<1x4x128xf32>
    %11 = vector.shape_cast %10 : vector<1x4x128xf32> to vector<4x128xf32>
    %12 = vector.shape_cast %9 : vector<4x128xf32> to vector<1x4x128xf32>
    tpu.vector_store %arg4[%c0_8, %c0_9, %c0_10], %12 {strides = array<i32>} : memref<1x4x128xf32, #tpu.memory_space<vmem>>, vector<1x4x128xf32>,
    return
  }
  func.func @transform_0(%arg0: i32, %arg1: i32) -> (i32, i32, i32) {
    %c0_i32 = arith.constant 0 : i32
    %c0_i32_0 = arith.constant 0 : i32
    return %arg0, %c0_i32, %arg1 : i32, i32, i32
  }
  func.func @transform_1(%arg0: i32, %arg1: i32) -> (i32, i32) {
    %c0_i32 = arith.constant 0 : i32
    %c0_i32_0 = arith.constant 0 : i32
    return %arg1, %c0_i32 : i32, i32
  }
  func.func @transform_2(%arg0: i32, %arg1: i32) -> (i32, i32, i32) {
    %c0_i32 = arith.constant 0 : i32
    %c0_i32_0 = arith.constant 0 : i32
    %c0_i32_1 = arith.constant 0 : i32
    return %arg0, %c0_i32, %c0_i32_0 : i32, i32, i32
  }
}

</mosaic_0001>

<llo_original>
// kernel: forward.3
$region0: #{forward.3}
  #allocation0 [shape = 'u32[]', space=smem, size = 0x4, offset = 0x4, fixed_abs, tag = 'smem constant byte address 0x4 - core index']
  #allocation1 [shape = 'u32[144,128]{1,0:T(1,128)}', space=vmem, size = 0x12000, scoped, tag = 'internal scratch']
  %s0 = inlined_call_operand.vmem [shape: f32[2,4,256], index: 0, kind: input, shape index: {}]
  %s1 = inlined_call_operand.vmem [shape: f32[2,4,128], index: 1, kind: input, shape index: {}]
  %s2 = inlined_call_operand.vmem [shape: f32[4,4], index: 2, kind: input, shape index: {}]
  %s3 = inlined_call_operand.vmem [shape: f32[4,1], index: 3, kind: input, shape index: {}]
  %s4 = inlined_call_operand.vmem [shape: f32[4,128], index: 4, kind: input, shape index: {}]
  %s5 = inlined_call_operand.vmem [shape: f32[128,256], index: 5, kind: input, shape index: {}]
  %s6 = inlined_call_operand.vmem [shape: f32[2,8,256], index: 6, kind: output, shape index: {}]
  %s7 = sld [smem:[#allocation0]]
  $region95: #{forward.3} parent=0
    _
  %s9 = ssub.s32 1, %s7
  %s10 = scalar_select 0, %s9, %s7
  $region1: #{forward.3} parent=0
    #allocation2 [shape = 'u8[131072]{0}', space=vmem, size = 0x20000, scoped, tag = 'input window, operand 5']
    loop: start=0, step=1, limit=6
    $region2: #{forward.3} parent=1 // loop_pre_header
      _
    $region3: #{forward.3} parent=1 // loop_header
      %s12 = sphi 0, %s16
      %p13 = scmp.ge.s32.totalorder %s12, 6
      %s19 = sphi 0, %s31
      %s20 = sphi 0, %s27
      %s21 = sphi 0, %s19
      %s22 = sphi 0, %s20
      %s23 = sphi 0, %s21
      %s24 = sphi 0, %s22
      %s36 = sphi 0, %s38
      %s39 = sphi 0, %s36
      %s40 = sphi 0, %s39
      %s56 = sphi 0, %s40
      %s62 = sphi 0, %s64
      %s65 = sphi 0, %s62
      %s66 = sphi 0, %s65
      %s82 = sphi 0, %s66
      %s86 = sphi 0, %s86
      %s88 = sphi 0, %s86
      %s89 = sphi 0, %s88
      %s103 = sphi 0, %s89
      %s107 = sphi 0, %s107
      %s109 = sphi 0, %s107
      %s110 = sphi 0, %s109
      %s124 = sphi 0, %s110
      %s128 = sphi 0, %s128
      %s130 = sphi 0, %s128
      %s131 = sphi 0, %s130
      %s145 = sphi 0, %s131
      %s151 = sphi 0, %s153
      %s154 = sphi 0, %s151
      %s155 = sphi 0, %s154
      %s171 = sphi 0, %s155
      %s179 = sphi 0, %s181
      %s182 = sphi 0, %s179
      %s183 = sphi 0, %s182
      %s199 = sphi 0, %s183
    $region4: #{forward.3} parent=1 // loop_header_branch
      %15 = sbr.rel (%p13) target = $region8
    $region5: #{forward.3} parent=1 // loop_body
      %s17 = ssub.s32 %s12, 1
      %s18 = ssub.s32 %s12, 2
      %s25 = sadd.s32 1, %s20
      %p26 = scmp.ge.s32.totalorder %s25, 2
      %s27 = scalar_select %p26, 0, %s25
      %s28 = sadd.s32 1, %s19
      %s29 = scalar_select %p26, %s28, %s19
      %p30 = scmp.ge.s32.totalorder %s29, 2
      %s31 = scalar_select %p30, 0, %s29
      %s32 = ssub.s32 %s19, %s31
      %s33 = ssub.s32 %s20, %s27
      %s34 = sor.u32 %s32, %s33
      %p35 = scmp.eq.s32.totalorder %s34, 0
      %s37 = sadd.s32 %s36, 1
      %s38 = scalar_select %p35, %s36, %s37
      %p41 = pneg %p35
      %p42 = scmp.eq.s32.totalorder %s12, 3
      %p43 = por %p41, %p42
      %p44 = scmp.ne.s32.totalorder %s36, %s39
      %p45 = scmp.eq.s32.totalorder %s12, 0
      %p46 = por %p44, %p45
      %p47 = scmp.ne.s32.totalorder %s36, %s39
      %p48 = scmp.eq.s32.totalorder %s17, 3
      %p49 = por %p47, %p48
      %p50 = scmp.ne.s32.totalorder %s39, %s40
      %p51 = scmp.eq.s32.totalorder %s17, 0
      %p52 = por %p50, %p51
      %p53 = scmp.ne.s32.totalorder %s39, %s40
      %p54 = scmp.eq.s32.totalorder %s18, 3
      %p55 = por %p53, %p54
      %p57 = scmp.ne.s32.totalorder %s40, %s56
      %p58 = scmp.eq.s32.totalorder %s18, 0
      %p59 = por %p57, %p58
      %s60 = ssub.s32 %s19, %s31
      %p61 = scmp.eq.s32.totalorder %s60, 0
      %s63 = sadd.s32 %s62, 1
      %s64 = scalar_select %p61, %s62, %s63
      %p67 = pneg %p61
      %p68 = scmp.eq.s32.totalorder %s12, 3
      %p69 = por %p67, %p68
      %p70 = scmp.ne.s32.totalorder %s62, %s65
      %p71 = scmp.eq.s32.totalorder %s12, 0
      %p72 = por %p70, %p71
      %p73 = scmp.ne.s32.totalorder %s62, %s65
      %p74 = scmp.eq.s32.totalorder %s17, 3
      %p75 = por %p73, %p74
      %p76 = scmp.ne.s32.totalorder %s65, %s66
      %p77 = scmp.eq.s32.totalorder %s17, 0
      %p78 = por %p76, %p77
      %p79 = scmp.ne.s32.totalorder %s65, %s66
      %p80 = scmp.eq.s32.totalorder %s18, 3
      %p81 = por %p79, %p80
      %p83 = scmp.ne.s32.totalorder %s66, %s82
      %p84 = scmp.eq.s32.totalorder %s18, 0
      %p85 = por %p83, %p84
      %s87 = sadd.s32 %s86, 1
      %p90 = scmp.eq.s32.totalorder %s12, 3
      %p91 = scmp.ne.s32.totalorder %s86, %s88
      %p92 = scmp.eq.s32.totalorder %s12, 0
      %p93 = por %p91, %p92
      %p94 = scmp.ne.s32.totalorder %s86, %s88
      %p95 = scmp.eq.s32.totalorder %s17, 3
      %p96 = por %p94, %p95
      %p97 = scmp.ne.s32.totalorder %s88, %s89
      %p98 = scmp.eq.s32.totalorder %s17, 0
      %p99 = por %p97, %p98
      %p100 = scmp.ne.s32.totalorder %s88, %s89
      %p101 = scmp.eq.s32.totalorder %s18, 3
      %p102 = por %p100, %p101
      %p104 = scmp.ne.s32.totalorder %s89, %s103
      %p105 = scmp.eq.s32.totalorder %s18, 0
      %p106 = por %p104, %p105
      %s108 = sadd.s32 %s107, 1
      %p111 = scmp.eq.s32.totalorder %s12, 3
      %p112 = scmp.ne.s32.totalorder %s107, %s109
      %p113 = scmp.eq.s32.totalorder %s12, 0
      %p114 = por %p112, %p113
      %p115 = scmp.ne.s32.totalorder %s107, %s109
      %p116 = scmp.eq.s32.totalorder %s17, 3
      %p117 = por %p115, %p116
      %p118 = scmp.ne.s32.totalorder %s109, %s110
      %p119 = scmp.eq.s32.totalorder %s17, 0
      %p120 = por %p118, %p119
      %p121 = scmp.ne.s32.totalorder %s109, %s110
      %p122 = scmp.eq.s32.totalorder %s18, 3
      %p123 = por %p121, %p122
      %p125 = scmp.ne.s32.totalorder %s110, %s124
      %p126 = scmp.eq.s32.totalorder %s18, 0
      %p127 = por %p125, %p126
      %s129 = sadd.s32 %s128, 1
      %p132 = scmp.eq.s32.totalorder %s12, 3
      %p133 = scmp.ne.s32.totalorder %s128, %s130
      %p134 = scmp.eq.s32.totalorder %s12, 0
      %p135 = por %p133, %p134
      %p136 = scmp.ne.s32.totalorder %s128, %s130
      %p137 = scmp.eq.s32.totalorder %s17, 3
      %p138 = por %p136, %p137
      %p139 = scmp.ne.s32.totalorder %s130, %s131
      %p140 = scmp.eq.s32.totalorder %s17, 0
      %p141 = por %p139, %p140
      %p142 = scmp.ne.s32.totalorder %s130, %s131
      %p143 = scmp.eq.s32.totalorder %s18, 3
      %p144 = por %p142, %p143
      %p146 = scmp.ne.s32.totalorder %s131, %s145
      %p147 = scmp.eq.s32.totalorder %s18, 0
      %p148 = por %p146, %p147
      %s149 = ssub.s32 %s20, %s27
      %p150 = scmp.eq.s32.totalorder %s149, 0
      %s152 = sadd.s32 %s151, 1
      %s153 = scalar_select %p150, %s151, %s152
      %p156 = pneg %p150
      %p157 = scmp.eq.s32.totalorder %s12, 3
      %p158 = por %p156, %p157
      %p159 = scmp.ne.s32.totalorder %s151, %s154
      %p160 = scmp.eq.s32.totalorder %s12, 0
      %p161 = por %p159, %p160
      %p162 = scmp.ne.s32.totalorder %s151, %s154
      %p163 = scmp.eq.s32.totalorder %s17, 3
      %p164 = por %p162, %p163
      %p165 = scmp.ne.s32.totalorder %s154, %s155
      %p166 = scmp.eq.s32.totalorder %s17, 0
      %p167 = por %p165, %p166
      %p168 = scmp.ne.s32.totalorder %s154, %s155
      %p169 = scmp.eq.s32.totalorder %s18, 3
      %p170 = por %p168, %p169
      %p172 = scmp.ne.s32.totalorder %s155, %s171
      %p173 = scmp.eq.s32.totalorder %s18, 0
      %p174 = por %p172, %p173
      %s175 = ssub.s32 %s19, %s31
      %s176 = ssub.s32 %s20, %s27
      %s177 = sor.u32 %s175, %s176
      %p178 = scmp.eq.s32.totalorder %s177, 0
      %s180 = sadd.s32 %s179, 1
      %s181 = scalar_select %p178, %s179, %s180
      %p184 = pneg %p178
      %p185 = scmp.eq.s32.totalorder %s12, 3
      %p186 = por %p184, %p185
      %p187 = scmp.ne.s32.totalorder %s179, %s182
      %p188 = scmp.eq.s32.totalorder %s12, 0
      %p189 = por %p187, %p188
      %p190 = scmp.ne.s32.totalorder %s179, %s182
      %p191 = scmp.eq.s32.totalorder %s17, 3
      %p192 = por %p190, %p191
      %p193 = scmp.ne.s32.totalorder %s182, %s183
      %p194 = scmp.eq.s32.totalorder %s17, 0
      %p195 = por %p193, %p194
      %p196 = scmp.ne.s32.totalorder %s182, %s183
      %p197 = scmp.eq.s32.totalorder %s18, 3
      %p198 = por %p196, %p197
      %p200 = scmp.ne.s32.totalorder %s183, %s199
      %p201 = scmp.eq.s32.totalorder %s18, 0
      %p202 = por %p200, %p201
      %p203 = scmp.le.s32.totalorder 1, %s12
      %p204 = scmp.lt.s32.totalorder %s12, 5
      %p205 = pnand %p203, %p204
      %p206 = pneg %p205
      // Predicated region
      $region9: #{forward.3} parent=5 // pred_check
        _
      $region10: #{forward.3} parent=5 // pred_check_branch
        %208 = sbr.rel (%p205) target = $region12
      $region11: #{forward.3} parent=5 // pred_region
        %s209 = ssub.s32 %s12, 1
        // Predicated region
        $region13: #{forward.3} parent=11 // pred_check
          %p210 = pneg %p99
        $region14: #{forward.3} parent=11 // pred_check_branch
          %212 = sbr.rel (%p210) target = $region16
        $region15: #{forward.3} parent=11 // pred_region
          _
        $region16: #{forward.3} parent=11 // pred_fallthru
          _
        // Predicated region
        $region17: #{forward.3} parent=11 // pred_check
          %p213 = pneg %p120
        $region18: #{forward.3} parent=11 // pred_check_branch
          %215 = sbr.rel (%p213) target = $region20
        $region19: #{forward.3} parent=11 // pred_region
          _
        $region20: #{forward.3} parent=11 // pred_fallthru
          _
        // Predicated region
        $region21: #{forward.3} parent=11 // pred_check
          %p216 = pneg %p141
        $region22: #{forward.3} parent=11 // pred_check_branch
          %218 = sbr.rel (%p216) target = $region24
        $region23: #{forward.3} parent=11 // pred_region
          _
        $region24: #{forward.3} parent=11 // pred_fallthru
          _
      $region12: #{forward.3} parent=5 // pred_fallthru
        _
      %p219 = scmp.lt.s32.totalorder %s12, 4
      // Predicated region
      $region25: #{forward.3} parent=5 // pred_check
        %p220 = pneg %p219
      $region26: #{forward.3} parent=5 // pred_check_branch
        %222 = sbr.rel (%p220) target = $region28
      $region27: #{forward.3} parent=5 // pred_region
        // Predicated region
        $region29: #{forward.3} parent=27 // pred_check
          %p223 = pneg %p46
        $region30: #{forward.3} parent=27 // pred_check_branch
          %225 = sbr.rel (%p223) target = $region32
        $region31: #{forward.3} parent=27 // pred_region
          %p226 = scmp.lt.s32.totalorder %s19, 1
          %s227 = scalar_select %p226, %s19, 1
          %p228 = scmp.lt.s32.totalorder %s20, 1
          %s229 = scalar_select %p228, %s20, 1
          %s230 = smul.addr %s227, 2
          %s231 = sadd.s32 %s229, %s230
          %s232 = smul.addr %s231, 4
          %s233 = scalar_lea.vmem %s0, %s232
        $region32: #{forward.3} parent=27 // pred_fallthru
          _
        // Predicated region
        $region33: #{forward.3} parent=27 // pred_check
          %p234 = pneg %p72
        $region34: #{forward.3} parent=27 // pred_check_branch
          %236 = sbr.rel (%p234) target = $region36
        $region35: #{forward.3} parent=27 // pred_region
          %p237 = scmp.lt.s32.totalorder %s19, 1
          %s238 = scalar_select %p237, %s19, 1
          %s239 = smul.addr %s238, 4
          %s240 = scalar_lea.vmem %s1, %s239
        $region36: #{forward.3} parent=27 // pred_fallthru
          _
        // Predicated region
        $region37: #{forward.3} parent=27 // pred_check
          %p241 = pneg %p161
        $region38: #{forward.3} parent=27 // pred_check_branch
          %243 = sbr.rel (%p241) target = $region40
        $region39: #{forward.3} parent=27 // pred_region
          %s244 = sand.u32 %s151, 1
          %s245 = sand.u32 %s151, 1
          %s246 = smul.addr %s245, 128
          %s247 = scalar_lea.vmem [#allocation2], %s246
          %s248 = smul.addr %s20, 8
          %s249 = scalar_lea.vmem %s5, %s248
          // Predicated region
          $region41: #{forward.3} parent=39 // pred_check
            _
          $region42: #{forward.3} parent=39 // pred_check_branch
            %251 = sbr.rel (0) target = $region44
          $region43: #{forward.3} parent=39 // pred_region
            // Predicated region
            $region45: #{forward.3} parent=43 // pred_check
              _
            $region46: #{forward.3} parent=43 // pred_check_branch
              %253 = sbr.rel (0) target = $region48
            $region47: #{forward.3} parent=43 // pred_region
              // Predicated region
              $region60: #{forward.3} parent=47 // pred_check
                _
              $region61: #{forward.3} parent=47 // pred_check_branch
                %299 = sbr.rel (0) target = $region63
              $region62: #{forward.3} parent=47 // pred_region
                loop: start=0, step=1, limit=1
                $region64: #{forward.3} parent=62 // loop_pre_header
                  _
                $region65: #{forward.3} parent=62 // loop_header
                  %s301 = sphi 0, %s305
                  %p302 = scmp.ge.s32.totalorder %s301, 1
                  %s306 = sphi %s249, %s249
                  %s307 = sphi %s247, %s247
                $region66: #{forward.3} parent=62 // loop_header_branch
                  %304 = sbr.rel (%p302) target = $region70
                $region67: #{forward.3} parent=62 // loop_body
                  %v308 = vld [vmem:[%s306] sm:$0xff]
                  %309 = vst [vmem:[%s307] sm:$0xff] %v308
                  %v310 = vld [vmem:[%s306 + $0x10] sm:$0xff]
                  %311 = vst [vmem:[%s307 + $0x8] sm:$0xff] %v310
                  %v312 = vld [vmem:[%s306 + $0x20] sm:$0xff]
                  %313 = vst [vmem:[%s307 + $0x10] sm:$0xff] %v312
                  %v314 = vld [vmem:[%s306 + $0x30] sm:$0xff]
                  %315 = vst [vmem:[%s307 + $0x18] sm:$0xff] %v314
                  %v316 = vld [vmem:[%s306 + $0x40] sm:$0xff]
                  %317 = vst [vmem:[%s307 + $0x20] sm:$0xff] %v316
                  %v318 = vld [vmem:[%s306 + $0x50] sm:$0xff]
                  %319 = vst [vmem:[%s307 + $0x28] sm:$0xff] %v318
                  %v320 = vld [vmem:[%s306 + $0x60] sm:$0xff]
                  %321 = vst [vmem:[%s307 + $0x30] sm:$0xff] %v320
                  %v322 = vld [vmem:[%s306 + $0x70] sm:$0xff]
                  %323 = vst [vmem:[%s307 + $0x38] sm:$0xff] %v322
                  %v324 = vld [vmem:[%s306 + $0x80] sm:$0xff]
                  %325 = vst [vmem:[%s307 + $0x40] sm:$0xff] %v324
                  %v326 = vld [vmem:[%s306 + $0x90] sm:$0xff]
                  %327 = vst [vmem:[%s307 + $0x48] sm:$0xff] %v326
                  %v328 = vld [vmem:[%s306 + $0xa0] sm:$0xff]
                  %329 = vst [vmem:[%s307 + $0x50] sm:$0xff] %v328
                  %v330 = vld [vmem:[%s306 + $0xb0] sm:$0xff]
                  %331 = vst [vmem:[%s307 + $0x58] sm:$0xff] %v330
                  %v332 = vld [vmem:[%s306 + $0xc0] sm:$0xff]
                  %333 = vst [vmem:[%s307 + $0x60] sm:$0xff] %v332
                  %v334 = vld [vmem:[%s306 + $0xd0] sm:$0xff]
                  %335 = vst [vmem:[%s307 + $0x68] sm:$0xff] %v334
                  %v336 = vld [vmem:[%s306 + $0xe0] sm:$0xff]
                  %337 = vst [vmem:[%s307 + $0x70] sm:$0xff] %v336
                  %v338 = vld [vmem:[%s306 + $0xf0] sm:$0xff]
                  %339 = vst [vmem:[%s307 + $0x78] sm:$0xff] %v338
                $region68: #{forward.3} parent=62 // loop_footer
                  %s305 = sadd.s32 1, %s301
                $region69: #{forward.3} parent=62 // loop_footer_branch
                  %300 = sbr.rel target = $region65
                $region70: #{forward.3} parent=62 // loop_exit
                  _
              $region63: #{forward.3} parent=47 // pred_fallthru
                _
              // Predicated region
              $region71: #{forward.3} parent=47 // pred_check
                _
              $region72: #{forward.3} parent=47 // pred_check_branch
                %341 = sbr.rel target = $region74
              $region73: #{forward.3} parent=47 // pred_region
                _
              $region74: #{forward.3} parent=47 // pred_fallthru
                _
            $region48: #{forward.3} parent=43 // pred_fallthru
              _
            // Predicated region
            $region49: #{forward.3} parent=43 // pred_check
              _
            $region50: #{forward.3} parent=43 // pred_check_branch
              %255 = sbr.rel target = $region52
            $region51: #{forward.3} parent=43 // pred_region
              %s257 = ssub.s32 256, 1
              loop: start=0, step=1, limit=1
              $region53: #{forward.3} parent=51 // loop_pre_header
                _
              $region54: #{forward.3} parent=51 // loop_header
                %s259 = sphi 0, %s263
                %p260 = scmp.ge.s32.totalorder %s259, 1
                %s264 = sphi %s249, %s249
                %s265 = sphi %s247, %s247
              $region55: #{forward.3} parent=51 // loop_header_branch
                %262 = sbr.rel (%p260) target = $region59
              $region56: #{forward.3} parent=51 // loop_body
                %v266 = vld [vmem:[%s264] sm:%s257]
                %267 = vst [vmem:[%s265] sm:%s257] %v266
                %v268 = vld [vmem:[%s264 + $0x10] sm:%s257]
                %269 = vst [vmem:[%s265 + $0x8] sm:%s257] %v268
                %v270 = vld [vmem:[%s264 + $0x20] sm:%s257]
                %271 = vst [vmem:[%s265 + $0x10] sm:%s257] %v270
                %v272 = vld [vmem:[%s264 + $0x30] sm:%s257]
                %273 = vst [vmem:[%s265 + $0x18] sm:%s257] %v272
                %v274 = vld [vmem:[%s264 + $0x40] sm:%s257]
                %275 = vst [vmem:[%s265 + $0x20] sm:%s257] %v274
                %v276 = vld [vmem:[%s264 + $0x50] sm:%s257]
                %277 = vst [vmem:[%s265 + $0x28] sm:%s257] %v276
                %v278 = vld [vmem:[%s264 + $0x60] sm:%s257]
                %279 = vst [vmem:[%s265 + $0x30] sm:%s257] %v278
                %v280 = vld [vmem:[%s264 + $0x70] sm:%s257]
                %281 = vst [vmem:[%s265 + $0x38] sm:%s257] %v280
                %v282 = vld [vmem:[%s264 + $0x80] sm:%s257]
                %283 = vst [vmem:[%s265 + $0x40] sm:%s257] %v282
                %v284 = vld [vmem:[%s264 + $0x90] sm:%s257]
                %285 = vst [vmem:[%s265 + $0x48] sm:%s257] %v284
                %v286 = vld [vmem:[%s264 + $0xa0] sm:%s257]
                %287 = vst [vmem:[%s265 + $0x50] sm:%s257] %v286
                %v288 = vld [vmem:[%s264 + $0xb0] sm:%s257]
                %289 = vst [vmem:[%s265 + $0x58] sm:%s257] %v288
                %v290 = vld [vmem:[%s264 + $0xc0] sm:%s257]
                %291 = vst [vmem:[%s265 + $0x60] sm:%s257] %v290
                %v292 = vld [vmem:[%s264 + $0xd0] sm:%s257]
                %293 = vst [vmem:[%s265 + $0x68] sm:%s257] %v292
                %v294 = vld [vmem:[%s264 + $0xe0] sm:%s257]
                %295 = vst [vmem:[%s265 + $0x70] sm:%s257] %v294
                %v296 = vld [vmem:[%s264 + $0xf0] sm:%s257]
                %297 = vst [vmem:[%s265 + $0x78] sm:%s257] %v296
              $region57: #{forward.3} parent=51 // loop_footer
                %s263 = sadd.s32 1, %s259
              $region58: #{forward.3} parent=51 // loop_footer_branch
                %258 = sbr.rel target = $region54
              $region59: #{forward.3} parent=51 // loop_exit
                _
            $region52: #{forward.3} parent=43 // pred_fallthru
              _
          $region44: #{forward.3} parent=39 // pred_fallthru
            _
          %342 = vnop
        $region40: #{forward.3} parent=27 // pred_fallthru
          _
      $region28: #{forward.3} parent=5 // pred_fallthru
        _
      %p343 = scmp.le.s32.totalorder 1, %s12
      %p344 = scmp.lt.s32.totalorder %s12, 5
      %p345 = pnand %p343, %p344
      %p346 = pneg %p345
      // Predicated region
      $region75: #{forward.3} parent=5 // pred_check
        _
      $region76: #{forward.3} parent=5 // pred_check_branch
        %348 = sbr.rel (%p345) target = $region78
      $region77: #{forward.3} parent=5 // pred_region
        %s349 = ssub.s32 %s12, 1
        %s350 = sand.u32 %s154, 1
        %s351 = sand.u32 %s154, 1
        %s352 = smul.addr %s351, 128
        %s353 = scalar_lea.vmem [#allocation2], %s352
        // Predicated region
        $region79: #{forward.3} parent=77 // pred_check
          %p354 = pneg %p167
        $region80: #{forward.3} parent=77 // pred_check_branch
          %356 = sbr.rel (%p354) target = $region82
        $region81: #{forward.3} parent=77 // pred_region
          _
        $region82: #{forward.3} parent=77 // pred_fallthru
          _
        %p357 = scmp.lt.s32.totalorder %s21, 1
        %s358 = scalar_select %p357, %s21, 1
        %p359 = scmp.lt.s32.totalorder %s22, 1
        %s360 = scalar_select %p359, %s22, 1
        %s361 = smul.addr %s358, 2
        %s362 = sadd.s32 %s360, %s361
        %s363 = smul.addr %s362, 4
        %s364 = scalar_lea.vmem %s0, %s363
        %p365 = pneg %p52
        %p366 = pneg %p49
        %p367 = scmp.lt.s32.totalorder %s21, 1
        %s368 = scalar_select %p367, %s21, 1
        %s369 = smul.addr %s368, 4
        %s370 = scalar_lea.vmem %s1, %s369
        %p371 = pneg %p78
        %p372 = pneg %p75
        %p373 = pneg %p99
        %p374 = pneg %p96
        %p375 = pneg %p120
        %p376 = pneg %p117
        %p377 = pneg %p141
        %p378 = pneg %p138
        %s379 = sand.u32 %s154, 1
        %s380 = sand.u32 %s154, 1
        %s381 = smul.addr %s380, 128
        %s382 = scalar_lea.vmem [#allocation2], %s381
        %p383 = pneg %p167
        %p384 = pneg %p164
        %p385 = pneg %p195
        %p386 = pneg %p192
        %p387 = scmp.lt.s32.totalorder %s21, 1
        %s388 = scalar_select %p387, %s21, 1
        %p389 = scmp.lt.s32.totalorder %s22, 1
        %s390 = scalar_select %p389, %s22, 1
        %s391 = smul.addr %s388, 2
        %s392 = sadd.s32 %s390, %s391
        %s393 = smul.addr %s392, 8
        %s394 = scalar_lea.vmem %s6, %s393
        %p395 = scmp.lt.s32.totalorder %s21, 1
        %s396 = scalar_select %p395, %s21, 1
        %p397 = scmp.lt.s32.totalorder %s22, 1
        %s398 = scalar_select %p397, %s22, 1
        %s399 = smul.addr %s396, 2
        %s400 = sadd.s32 %s398, %s399
        %s401 = smul.addr %s400, 4
        %s402 = scalar_lea.vmem %s0, %s401
        %p403 = scmp.lt.s32.totalorder %s21, 1
        %s404 = scalar_select %p403, %s21, 1
        %s405 = smul.addr %s404, 4
        %s406 = scalar_lea.vmem %s1, %s405
        %p407 = scmp.lt.s32.totalorder %s21, 1
        %s408 = scalar_select %p407, %s21, 1
        %p409 = scmp.lt.s32.totalorder %s22, 1
        %s410 = scalar_select %p409, %s22, 1
        %s411 = smul.addr %s408, 2
        %s412 = sadd.s32 %s410, %s411
        %s413 = smul.addr %s412, 8
        %s414 = scalar_lea.vmem %s6, %s413
        %v415 = vld [vmem:[%s402] sm:$0xf]
        %416 = vst [vmem:[%s414] sm:$0xf] %v415
        %v417 = vld [vmem:[%s2] sm:$0xf]
        %v418 = vld [vmem:[%s406] sm:$0xf]
        %v419 = vld [vmem:[%s3] sm:$0xf]
        %421 = vset.pattern.permute.xlu0 0
        %422 = vperm.xlu0 %421, %v419
        %v423 = vpop.permute.xlu0 %422
        %vm425 = vcmask 31744
        %v427 = vsel %vm425, %v417, 0
        %vm429 = vcmask 1043456
        %v431 = vsel %vm429, %v418, 0
        %433 = vmatprep.subr.mxu0 0.0
        %434 = vmatpush1.msra.mxu0 0.0
        %435 = vmatprep.subr.mxu0 0.0
        %436 = vmatpush1.msra.mxu0 0.0
        %437 = vmatprep.subr.mxu0 0.0
        %438 = vmatpush1.msra.mxu0 0.0
        %439 = vmatprep.subr.mxu0 0.0
        %440 = vmatpush1.msra.mxu0 0.0
        %441 = vmatprep.subr.mxu0 0.0
        %442 = vmatpush1.msra.mxu0 0.0
        %443 = vmatprep.subr.mxu0 0.0
        %444 = vmatpush1.msra.mxu0 0.0
        %445 = vmatprep.subr.mxu0 0.0
        %446 = vmatpush1.msra.mxu0 0.0
        %447 = vmatprep.subr.mxu0 0.0
        %448 = vmatpush1.msra.mxu0 0.0
        %449 = vmatprep.subr.mxu0 0.0
        %450 = vmatpush1.msra.mxu0 0.0
        %451 = vmatprep.subr.mxu0 0.0
        %452 = vmatpush1.msra.mxu0 0.0
        %453 = vmatprep.subr.mxu0 0.0
        %454 = vmatpush1.msra.mxu0 0.0
        %455 = vmatprep.subr.mxu0 0.0
        %456 = vmatpush1.msra.mxu0 0.0
        %457 = vmatprep.subr.mxu0 0.0
        %458 = vmatpush1.msra.mxu0 0.0
        %459 = vmatprep.subr.mxu0 0.0
        %460 = vmatpush1.msra.mxu0 0.0
        %461 = vmatprep.subr.mxu0 0.0
        %462 = vmatpush1.msra.mxu0 0.0
        %463 = vmatprep.subr.mxu0 0.0
        %464 = vmatpush1.msra.mxu0 %v431
        %465 = vmatprep.subr.mxu0 0.0
        %466 = vmatpush2.msra.mxu0 0.0
        %467 = vmatprep.subr.mxu0 0.0
        %468 = vmatpush2.msra.mxu0 0.0
        %469 = vmatprep.subr.mxu0 0.0
        %470 = vmatpush2.msra.mxu0 0.0
        %471 = vmatprep.subr.mxu0 0.0
        %472 = vmatpush2.msra.mxu0 0.0
        %473 = vmatprep.subr.mxu0 0.0
        %474 = vmatpush2.msra.mxu0 0.0
        %475 = vmatprep.subr.mxu0 0.0
        %476 = vmatpush2.msra.mxu0 0.0
        %477 = vmatprep.subr.mxu0 0.0
        %478 = vmatpush2.msra.mxu0 0.0
        %479 = vmatprep.subr.mxu0 0.0
        %480 = vmatpush2.msra.mxu0 0.0
        %481 = vmatprep.subr.mxu0 0.0
        %482 = vmatpush2.msra.mxu0 0.0
        %483 = vmatprep.subr.mxu0 0.0
        %484 = vmatpush2.msra.mxu0 0.0
        %485 = vmatprep.subr.mxu0 0.0
        %486 = vmatpush2.msra.mxu0 0.0
        %487 = vmatprep.subr.mxu0 0.0
        %488 = vmatpush2.msra.mxu0 0.0
        %489 = vmatprep.subr.mxu0 0.0
        %490 = vmatpush2.msra.mxu0 0.0
        %491 = vmatprep.subr.mxu0 0.0
        %492 = vmatpush2.msra.mxu0 0.0
        %493 = vmatprep.subr.mxu0 0.0
        %494 = vmatpush2.msra.mxu0 0.0
        %495 = vmatprep.subr.mxu0 0.0
        %496 = vmatpush2.msra.mxu0 0.0
        %497 = vmatprep.mubr.f32.mxu0 0.0
        %498 = vmatmul.mubr.f32.gmra.mxu0 %v427
        %v499 = vpop.f32.mrf.mxu0
        %v500 = vadd.f32 %v423, %v499
        %v501 = vpop.f32.mrf.mxu0
        %502 = vdwg.mxu0
        %v503 = vmax.f32 %v500, 0.0
        %v504 = vld [vmem:[%s4] sm:$0xf]
        %v505 = vmul.f32 %v503, %v504
        %v506 = vld [vmem:[%s353] sm:$0xff]
        %v507 = vld [vmem:[%s353 + $0x8] sm:$0xff]
        %v508 = vld [vmem:[%s353 + $0x10] sm:$0xff]
        %v509 = vld [vmem:[%s353 + $0x18] sm:$0xff]
        %v510 = vld [vmem:[%s353 + $0x20] sm:$0xff]
        %v511 = vld [vmem:[%s353 + $0x28] sm:$0xff]
        %v512 = vld [vmem:[%s353 + $0x30] sm:$0xff]
        %v513 = vld [vmem:[%s353 + $0x38] sm:$0xff]
        %v514 = vld [vmem:[%s353 + $0x40] sm:$0xff]
        %v515 = vld [vmem:[%s353 + $0x48] sm:$0xff]
        %v516 = vld [vmem:[%s353 + $0x50] sm:$0xff]
        %v517 = vld [vmem:[%s353 + $0x58] sm:$0xff]
        %v518 = vld [vmem:[%s353 + $0x60] sm:$0xff]
        %v519 = vld [vmem:[%s353 + $0x68] sm:$0xff]
        %v520 = vld [vmem:[%s353 + $0x70] sm:$0xff]
        %v521 = vld [vmem:[%s353 + $0x78] sm:$0xff]
        %522 = vmatprep.subr.mxu0 0.0
        %523 = vmatpush1.msra.mxu0 %v521
        %524 = vmatprep.subr.mxu0 0.0
        %525 = vmatpush1.msra.mxu0 %v520
        %526 = vmatprep.subr.mxu0 0.0
        %527 = vmatpush1.msra.mxu0 %v519
        %528 = vmatprep.subr.mxu0 0.0
        %529 = vmatpush1.msra.mxu0 %v518
        %530 = vmatprep.subr.mxu0 0.0
        %531 = vmatpush1.msra.mxu0 %v517
        %532 = vmatprep.subr.mxu0 0.0
        %533 = vmatpush1.msra.mxu0 %v516
        %534 = vmatprep.subr.mxu0 0.0
        %535 = vmatpush1.msra.mxu0 %v515
        %536 = vmatprep.subr.mxu0 0.0
        %537 = vmatpush1.msra.mxu0 %v514
        %538 = vmatprep.subr.mxu0 0.0
        %539 = vmatpush1.msra.mxu0 %v513
        %540 = vmatprep.subr.mxu0 0.0
        %541 = vmatpush1.msra.mxu0 %v512
        %542 = vmatprep.subr.mxu0 0.0
        %543 = vmatpush1.msra.mxu0 %v511
        %544 = vmatprep.subr.mxu0 0.0
        %545 = vmatpush1.msra.mxu0 %v510
        %546 = vmatprep.subr.mxu0 0.0
        %547 = vmatpush1.msra.mxu0 %v509
        %548 = vmatprep.subr.mxu0 0.0
        %549 = vmatpush1.msra.mxu0 %v508
        %550 = vmatprep.subr.mxu0 0.0
        %551 = vmatpush1.msra.mxu0 %v507
        %552 = vmatprep.subr.mxu0 0.0
        %553 = vmatpush1.msra.mxu0 %v506
        %554 = vmatprep.subr.mxu0 0.0
        %555 = vmatpush2.msra.mxu0 0.0
        %556 = vmatprep.subr.mxu0 0.0
        %557 = vmatpush2.msra.mxu0 0.0
        %558 = vmatprep.subr.mxu0 0.0
        %559 = vmatpush2.msra.mxu0 0.0
        %560 = vmatprep.subr.mxu0 0.0
        %561 = vmatpush2.msra.mxu0 0.0
        %562 = vmatprep.subr.mxu0 0.0
        %563 = vmatpush2.msra.mxu0 0.0
        %564 = vmatprep.subr.mxu0 0.0
        %565 = vmatpush2.msra.mxu0 0.0
        %566 = vmatprep.subr.mxu0 0.0
        %567 = vmatpush2.msra.mxu0 0.0
        %568 = vmatprep.subr.mxu0 0.0
        %569 = vmatpush2.msra.mxu0 0.0
        %570 = vmatprep.subr.mxu0 0.0
        %571 = vmatpush2.msra.mxu0 0.0
        %572 = vmatprep.subr.mxu0 0.0
        %573 = vmatpush2.msra.mxu0 0.0
        %574 = vmatprep.subr.mxu0 0.0
        %575 = vmatpush2.msra.mxu0 0.0
        %576 = vmatprep.subr.mxu0 0.0
        %577 = vmatpush2.msra.mxu0 0.0
        %578 = vmatprep.subr.mxu0 0.0
        %579 = vmatpush2.msra.mxu0 0.0
        %580 = vmatprep.subr.mxu0 0.0
        %581 = vmatpush2.msra.mxu0 0.0
        %582 = vmatprep.subr.mxu0 0.0
        %583 = vmatpush2.msra.mxu0 0.0
        %584 = vmatprep.subr.mxu0 0.0
        %585 = vmatpush2.msra.mxu0 0.0
        %586 = vmatprep.mubr.f32.mxu0 0.0
        %587 = vmatmul.mubr.f32.gmra.mxu0 %v505
        %v588 = vpop.f32.mrf.mxu0
        %v589 = vadd.f32 0.0, %v588
        %v590 = vpop.f32.mrf.mxu0
        %591 = vdwg.mxu0
        %592 = vst [vmem:[%s414 + $0x4] sm:$0xf] %v589
        %p593 = scmp.lt.s32.totalorder %s21, 1
        %s594 = scalar_select %p593, %s21, 1
        %p595 = scmp.lt.s32.totalorder %s22, 1
        %s596 = scalar_select %p595, %s22, 1
        %s597 = smul.addr %s594, 2
        %s598 = sadd.s32 %s596, %s597
        %s599 = smul.addr %s598, 8
        %s600 = scalar_lea.vmem %s6, %s599
        // Predicated region
        $region83: #{forward.3} parent=77 // pred_check
          %p601 = pneg %p192
        $region84: #{forward.3} parent=77 // pred_check_branch
          %603 = sbr.rel (%p601) target = $region86
        $region85: #{forward.3} parent=77 // pred_region
          _
        $region86: #{forward.3} parent=77 // pred_fallthru
          _
      $region78: #{forward.3} parent=5 // pred_fallthru
        _
      %p604 = scmp.le.s32.totalorder 2, %s12
      // Predicated region
      $region87: #{forward.3} parent=5 // pred_check
        %p605 = pneg %p604
      $region88: #{forward.3} parent=5 // pred_check_branch
        %607 = sbr.rel (%p605) target = $region90
      $region89: #{forward.3} parent=5 // pred_region
        %s608 = ssub.s32 %s12, 2
        // Predicated region
        $region91: #{forward.3} parent=89 // pred_check
          %p609 = pneg %p198
        $region92: #{forward.3} parent=89 // pred_check_branch
          %611 = sbr.rel (%p609) target = $region94
        $region93: #{forward.3} parent=89 // pred_region
          %p612 = scmp.lt.s32.totalorder %s23, 1
          %s613 = scalar_select %p612, %s23, 1
          %p614 = scmp.lt.s32.totalorder %s24, 1
          %s615 = scalar_select %p614, %s24, 1
          %s616 = smul.addr %s613, 2
          %s617 = sadd.s32 %s615, %s616
          %s618 = smul.addr %s617, 8
          %s619 = scalar_lea.vmem %s6, %s618
        $region94: #{forward.3} parent=89 // pred_fallthru
          _
      $region90: #{forward.3} parent=5 // pred_fallthru
        _
    $region6: #{forward.3} parent=1 // loop_footer
      %s16 = sadd.s32 1, %s12
    $region7: #{forward.3} parent=1 // loop_footer_branch
      %11 = sbr.rel target = $region3
    $region8: #{forward.3} parent=1 // loop_exit
      _

// kernel: forward.2
$region0: #{forward.2}
  #allocation0 [shape = 'u32[]', space=smem, size = 0x4, offset = 0x4, fixed_abs, tag = 'smem constant byte address 0x4 - core index']
  #allocation1 [shape = 'u32[144,128]{1,0:T(1,128)}', space=vmem, size = 0x12000, scoped, tag = 'internal scratch']
  %s0 = inlined_call_operand.vmem [shape: f32[2,4,256], index: 0, kind: input, shape index: {}]
  %s1 = inlined_call_operand.hbm [shape: f32[256,128], index: 1, kind: input, shape index: {}]
  %s2 = inlined_call_operand.vmem [shape: f32[2,4,128], index: 2, kind: output, shape index: {}]
  %s3 = sld [smem:[#allocation0]]
  $region49: #{forward.2} parent=0
    _
  %s5 = ssub.s32 1, %s3
  %s6 = scalar_select 0, %s5, %s3
  $region1: #{forward.2} parent=0
    #allocation2 [shape = 'u8[131072]{0}', space=vmem, size = 0x20000, scoped, tag = 'input window, operand 1']
    #allocation3 [shape = 's32[2]{0}', space=sflag, size = 0x8, scoped, tag = 'scoped memory for forward.2']
    %7 = vsyncpa [#allocation3], 0
    %s8 = scalar_lea.sflag [#allocation3], 1
    %9 = vsyncpa %s8, 0
    loop: start=0, step=1, limit=6
    $region2: #{forward.2} parent=1 // loop_pre_header
      _
    $region3: #{forward.2} parent=1 // loop_header
      %s11 = sphi 0, %s15
      %p12 = scmp.ge.s32.totalorder %s11, 6
      %s18 = sphi 0, %s30
      %s19 = sphi 0, %s26
      %s20 = sphi 0, %s18
      %s21 = sphi 0, %s19
      %s22 = sphi 0, %s20
      %s23 = sphi 0, %s21
      %s35 = sphi 0, %s37
      %s38 = sphi 0, %s35
      %s39 = sphi 0, %s38
      %s55 = sphi 0, %s39
      %s61 = sphi 0, %s63
      %s64 = sphi 0, %s61
      %s65 = sphi 0, %s64
      %s81 = sphi 0, %s65
      %s87 = sphi 0, %s89
      %s90 = sphi 0, %s87
      %s91 = sphi 0, %s90
      %s107 = sphi 0, %s91
    $region4: #{forward.2} parent=1 // loop_header_branch
      %14 = sbr.rel (%p12) target = $region8
    $region5: #{forward.2} parent=1 // loop_body
      %s16 = ssub.s32 %s11, 1
      %s17 = ssub.s32 %s11, 2
      %s24 = sadd.s32 1, %s19
      %p25 = scmp.ge.s32.totalorder %s24, 2
      %s26 = scalar_select %p25, 0, %s24
      %s27 = sadd.s32 1, %s18
      %s28 = scalar_select %p25, %s27, %s18
      %p29 = scmp.ge.s32.totalorder %s28, 2
      %s30 = scalar_select %p29, 0, %s28
      %s31 = ssub.s32 %s18, %s30
      %s32 = ssub.s32 %s19, %s26
      %s33 = sor.u32 %s31, %s32
      %p34 = scmp.eq.s32.totalorder %s33, 0
      %s36 = sadd.s32 %s35, 1
      %s37 = scalar_select %p34, %s35, %s36
      %p40 = pneg %p34
      %p41 = scmp.eq.s32.totalorder %s11, 3
      %p42 = por %p40, %p41
      %p43 = scmp.ne.s32.totalorder %s35, %s38
      %p44 = scmp.eq.s32.totalorder %s11, 0
      %p45 = por %p43, %p44
      %p46 = scmp.ne.s32.totalorder %s35, %s38
      %p47 = scmp.eq.s32.totalorder %s16, 3
      %p48 = por %p46, %p47
      %p49 = scmp.ne.s32.totalorder %s38, %s39
      %p50 = scmp.eq.s32.totalorder %s16, 0
      %p51 = por %p49, %p50
      %p52 = scmp.ne.s32.totalorder %s38, %s39
      %p53 = scmp.eq.s32.totalorder %s17, 3
      %p54 = por %p52, %p53
      %p56 = scmp.ne.s32.totalorder %s39, %s55
      %p57 = scmp.eq.s32.totalorder %s17, 0
      %p58 = por %p56, %p57
      %s59 = ssub.s32 %s19, %s26
      %p60 = scmp.eq.s32.totalorder %s59, 0
      %s62 = sadd.s32 %s61, 1
      %s63 = scalar_select %p60, %s61, %s62
      %p66 = pneg %p60
      %p67 = scmp.eq.s32.totalorder %s11, 3
      %p68 = por %p66, %p67
      %p69 = scmp.ne.s32.totalorder %s61, %s64
      %p70 = scmp.eq.s32.totalorder %s11, 0
      %p71 = por %p69, %p70
      %p72 = scmp.ne.s32.totalorder %s61, %s64
      %p73 = scmp.eq.s32.totalorder %s16, 3
      %p74 = por %p72, %p73
      %p75 = scmp.ne.s32.totalorder %s64, %s65
      %p76 = scmp.eq.s32.totalorder %s16, 0
      %p77 = por %p75, %p76
      %p78 = scmp.ne.s32.totalorder %s64, %s65
      %p79 = scmp.eq.s32.totalorder %s17, 3
      %p80 = por %p78, %p79
      %p82 = scmp.ne.s32.totalorder %s65, %s81
      %p83 = scmp.eq.s32.totalorder %s17, 0
      %p84 = por %p82, %p83
      %s85 = ssub.s32 %s18, %s30
      %p86 = scmp.eq.s32.totalorder %s85, 0
      %s88 = sadd.s32 %s87, 1
      %s89 = scalar_select %p86, %s87, %s88
      %p92 = pneg %p86
      %p93 = scmp.eq.s32.totalorder %s11, 3
      %p94 = por %p92, %p93
      %p95 = scmp.ne.s32.totalorder %s87, %s90
      %p96 = scmp.eq.s32.totalorder %s11, 0
      %p97 = por %p95, %p96
      %p98 = scmp.ne.s32.totalorder %s87, %s90
      %p99 = scmp.eq.s32.totalorder %s16, 3
      %p100 = por %p98, %p99
      %p101 = scmp.ne.s32.totalorder %s90, %s91
      %p102 = scmp.eq.s32.totalorder %s16, 0
      %p103 = por %p101, %p102
      %p104 = scmp.ne.s32.totalorder %s90, %s91
      %p105 = scmp.eq.s32.totalorder %s17, 3
      %p106 = por %p104, %p105
      %p108 = scmp.ne.s32.totalorder %s91, %s107
      %p109 = scmp.eq.s32.totalorder %s17, 0
      %p110 = por %p108, %p109
      %p111 = scmp.le.s32.totalorder 1, %s11
      %p112 = scmp.lt.s32.totalorder %s11, 5
      %p113 = pnand %p111, %p112
      %p114 = pneg %p113
      // Predicated region
      $region9: #{forward.2} parent=5 // pred_check
        _
      $region10: #{forward.2} parent=5 // pred_check_branch
        %116 = sbr.rel (%p113) target = $region12
      $region11: #{forward.2} parent=5 // pred_region
        %s117 = ssub.s32 %s11, 1
      $region12: #{forward.2} parent=5 // pred_fallthru
        _
      %p118 = scmp.lt.s32.totalorder %s11, 4
      // Predicated region
      $region13: #{forward.2} parent=5 // pred_check
        %p119 = pneg %p118
      $region14: #{forward.2} parent=5 // pred_check_branch
        %121 = sbr.rel (%p119) target = $region16
      $region15: #{forward.2} parent=5 // pred_region
        // Predicated region
        $region17: #{forward.2} parent=15 // pred_check
          %p122 = pneg %p45
        $region18: #{forward.2} parent=15 // pred_check_branch
          %124 = sbr.rel (%p122) target = $region20
        $region19: #{forward.2} parent=15 // pred_region
          %p125 = scmp.lt.s32.totalorder %s18, 1
          %s126 = scalar_select %p125, %s18, 1
          %p127 = scmp.lt.s32.totalorder %s19, 1
          %s128 = scalar_select %p127, %s19, 1
          %s129 = smul.addr %s126, 2
          %s130 = sadd.s32 %s128, %s129
          %s131 = smul.addr %s130, 4
          %s132 = scalar_lea.vmem %s0, %s131
        $region20: #{forward.2} parent=15 // pred_fallthru
          _
        // Predicated region
        $region21: #{forward.2} parent=15 // pred_check
          %p133 = pneg %p71
        $region22: #{forward.2} parent=15 // pred_check_branch
          %135 = sbr.rel (%p133) target = $region24
        $region23: #{forward.2} parent=15 // pred_region
          %s136 = sand.u32 %s61, 1
          %s137 = scalar_lea.sflag [#allocation3], %s136
          %s138 = sand.u32 %s61, 1
          %s139 = smul.addr %s138, 128
          %s140 = scalar_lea.vmem [#allocation2], %s139
          %s141 = smul.u32 16, %s19
          %s143 = ssub.s32 2048, 2048
          %144 = vsyncadd %s137, %s143
          %s145 = smul.addr %s141, 128
          %s146 = scalar_lea.hbm %s1, %s145
          %s147 = sshll.u32 %s140, 4
          %s148 = int_to_ptr.vmem [resolvable:$true] %s147
          %153 = dma.hbm_to_vmem [thread:$0]  %s146, 2048, %s148, %s137, 128, 128, 8
        $region24: #{forward.2} parent=15 // pred_fallthru
          _
      $region16: #{forward.2} parent=5 // pred_fallthru
        _
      %p154 = scmp.le.s32.totalorder 1, %s11
      %p155 = scmp.lt.s32.totalorder %s11, 5
      %p156 = pnand %p154, %p155
      %p157 = pneg %p156
      // Predicated region
      $region25: #{forward.2} parent=5 // pred_check
        _
      $region26: #{forward.2} parent=5 // pred_check_branch
        %159 = sbr.rel (%p156) target = $region28
      $region27: #{forward.2} parent=5 // pred_region
        %s160 = ssub.s32 %s11, 1
        %s161 = sand.u32 %s64, 1
        %s162 = scalar_lea.sflag [#allocation3], %s161
        %s163 = sand.u32 %s64, 1
        %s164 = smul.addr %s163, 128
        %s165 = scalar_lea.vmem [#allocation2], %s164
        // Predicated region
        $region29: #{forward.2} parent=27 // pred_check
          %p166 = pneg %p77
        $region30: #{forward.2} parent=27 // pred_check_branch
          %168 = sbr.rel (%p166) target = $region32
        $region31: #{forward.2} parent=27 // pred_region
          %169 = dma.done %s162, 2048
        $region32: #{forward.2} parent=27 // pred_fallthru
          _
        %p170 = scmp.lt.s32.totalorder %s20, 1
        %s171 = scalar_select %p170, %s20, 1
        %p172 = scmp.lt.s32.totalorder %s21, 1
        %s173 = scalar_select %p172, %s21, 1
        %s174 = smul.addr %s171, 2
        %s175 = sadd.s32 %s173, %s174
        %s176 = smul.addr %s175, 4
        %s177 = scalar_lea.vmem %s0, %s176
        %p178 = pneg %p51
        %p179 = pneg %p48
        %s180 = sand.u32 %s64, 1
        %s181 = scalar_lea.sflag [#allocation3], %s180
        %s182 = sand.u32 %s64, 1
        %s183 = smul.addr %s182, 128
        %s184 = scalar_lea.vmem [#allocation2], %s183
        %p185 = pneg %p77
        %p186 = pneg %p74
        %p187 = pneg %p103
        %p188 = pneg %p100
        %p189 = scmp.lt.s32.totalorder %s20, 1
        %s190 = scalar_select %p189, %s20, 1
        %s191 = smul.addr %s190, 4
        %s192 = scalar_lea.vmem %s2, %s191
        %p193 = scmp.lt.s32.totalorder %s20, 1
        %s194 = scalar_select %p193, %s20, 1
        %p195 = scmp.lt.s32.totalorder %s21, 1
        %s196 = scalar_select %p195, %s21, 1
        %s197 = smul.addr %s194, 2
        %s198 = sadd.s32 %s196, %s197
        %s199 = smul.addr %s198, 4
        %s200 = scalar_lea.vmem %s0, %s199
        %s201 = smul.u32 16, %s21
        %p202 = scmp.lt.s32.totalorder %s20, 1
        %s203 = scalar_select %p202, %s20, 1
        %s204 = smul.addr %s203, 4
        %s205 = scalar_lea.vmem %s2, %s204
        %p206 = scmp.eq.s32.totalorder %s21, 0
        // Predicated region
        $region33: #{forward.2} parent=27 // pred_check
          %p207 = pneg %p206
        $region34: #{forward.2} parent=27 // pred_check_branch
          %209 = sbr.rel (%p207) target = $region36
        $region35: #{forward.2} parent=27 // pred_region
          %210 = vst [vmem:[%s205] sm:$0xf] 0.0
        $region36: #{forward.2} parent=27 // pred_fallthru
          _
        %v211 = vld [vmem:[%s200] sm:$0xf]
        %v212 = vld [vmem:[%s205] sm:$0xf]
        %v213 = vld [vmem:[%s165] sm:$0xff]
        %v214 = vld [vmem:[%s165 + $0x8] sm:$0xff]
        %v215 = vld [vmem:[%s165 + $0x10] sm:$0xff]
        %v216 = vld [vmem:[%s165 + $0x18] sm:$0xff]
        %v217 = vld [vmem:[%s165 + $0x20] sm:$0xff]
        %v218 = vld [vmem:[%s165 + $0x28] sm:$0xff]
        %v219 = vld [vmem:[%s165 + $0x30] sm:$0xff]
        %v220 = vld [vmem:[%s165 + $0x38] sm:$0xff]
        %v221 = vld [vmem:[%s165 + $0x40] sm:$0xff]
        %v222 = vld [vmem:[%s165 + $0x48] sm:$0xff]
        %v223 = vld [vmem:[%s165 + $0x50] sm:$0xff]
        %v224 = vld [vmem:[%s165 + $0x58] sm:$0xff]
        %v225 = vld [vmem:[%s165 + $0x60] sm:$0xff]
        %v226 = vld [vmem:[%s165 + $0x68] sm:$0xff]
        %v227 = vld [vmem:[%s165 + $0x70] sm:$0xff]
        %v228 = vld [vmem:[%s165 + $0x78] sm:$0xff]
        %229 = vmatprep.subr.mxu0 0.0
        %230 = vmatpush1.msra.mxu0 %v228
        %231 = vmatprep.subr.mxu0 0.0
        %232 = vmatpush1.msra.mxu0 %v227
        %233 = vmatprep.subr.mxu0 0.0
        %234 = vmatpush1.msra.mxu0 %v226
        %235 = vmatprep.subr.mxu0 0.0
        %236 = vmatpush1.msra.mxu0 %v225
        %237 = vmatprep.subr.mxu0 0.0
        %238 = vmatpush1.msra.mxu0 %v224
        %239 = vmatprep.subr.mxu0 0.0
        %240 = vmatpush1.msra.mxu0 %v223
        %241 = vmatprep.subr.mxu0 0.0
        %242 = vmatpush1.msra.mxu0 %v222
        %243 = vmatprep.subr.mxu0 0.0
        %244 = vmatpush1.msra.mxu0 %v221
        %245 = vmatprep.subr.mxu0 0.0
        %246 = vmatpush1.msra.mxu0 %v220
        %247 = vmatprep.subr.mxu0 0.0
        %248 = vmatpush1.msra.mxu0 %v219
        %249 = vmatprep.subr.mxu0 0.0
        %250 = vmatpush1.msra.mxu0 %v218
        %251 = vmatprep.subr.mxu0 0.0
        %252 = vmatpush1.msra.mxu0 %v217
        %253 = vmatprep.subr.mxu0 0.0
        %254 = vmatpush1.msra.mxu0 %v216
        %255 = vmatprep.subr.mxu0 0.0
        %256 = vmatpush1.msra.mxu0 %v215
        %257 = vmatprep.subr.mxu0 0.0
        %258 = vmatpush1.msra.mxu0 %v214
        %259 = vmatprep.subr.mxu0 0.0
        %260 = vmatpush1.msra.mxu0 %v213
        %261 = vmatprep.subr.mxu0 0.0
        %262 = vmatpush2.msra.mxu0 0.0
        %263 = vmatprep.subr.mxu0 0.0
        %264 = vmatpush2.msra.mxu0 0.0
        %265 = vmatprep.subr.mxu0 0.0
        %266 = vmatpush2.msra.mxu0 0.0
        %267 = vmatprep.subr.mxu0 0.0
        %268 = vmatpush2.msra.mxu0 0.0
        %269 = vmatprep.subr.mxu0 0.0
        %270 = vmatpush2.msra.mxu0 0.0
        %271 = vmatprep.subr.mxu0 0.0
        %272 = vmatpush2.msra.mxu0 0.0
        %273 = vmatprep.subr.mxu0 0.0
        %274 = vmatpush2.msra.mxu0 0.0
        %275 = vmatprep.subr.mxu0 0.0
        %276 = vmatpush2.msra.mxu0 0.0
        %277 = vmatprep.subr.mxu0 0.0
        %278 = vmatpush2.msra.mxu0 0.0
        %279 = vmatprep.subr.mxu0 0.0
        %280 = vmatpush2.msra.mxu0 0.0
        %281 = vmatprep.subr.mxu0 0.0
        %282 = vmatpush2.msra.mxu0 0.0
        %283 = vmatprep.subr.mxu0 0.0
        %284 = vmatpush2.msra.mxu0 0.0
        %285 = vmatprep.subr.mxu0 0.0
        %286 = vmatpush2.msra.mxu0 0.0
        %287 = vmatprep.subr.mxu0 0.0
        %288 = vmatpush2.msra.mxu0 0.0
        %289 = vmatprep.subr.mxu0 0.0
        %290 = vmatpush2.msra.mxu0 0.0
        %291 = vmatprep.subr.mxu0 0.0
        %292 = vmatpush2.msra.mxu0 0.0
        %293 = vmatprep.mubr.f32.mxu0 0.0
        %294 = vmatmul.mubr.f32.gmra.mxu0 %v211
        %v295 = vpop.f32.mrf.mxu0
        %v296 = vadd.f32 0.0, %v295
        %v297 = vpop.f32.mrf.mxu0
        %298 = vdwg.mxu0
        %v299 = vadd.f32 %v212, %v296
        %300 = vst [vmem:[%s205] sm:$0xf] %v299
        %p301 = scmp.lt.s32.totalorder %s20, 1
        %s302 = scalar_select %p301, %s20, 1
        %s303 = smul.addr %s302, 4
        %s304 = scalar_lea.vmem %s2, %s303
        // Predicated region
        $region37: #{forward.2} parent=27 // pred_check
          %p305 = pneg %p100
        $region38: #{forward.2} parent=27 // pred_check_branch
          %307 = sbr.rel (%p305) target = $region40
        $region39: #{forward.2} parent=27 // pred_region
          _
        $region40: #{forward.2} parent=27 // pred_fallthru
          _
      $region28: #{forward.2} parent=5 // pred_fallthru
        _
      %p308 = scmp.le.s32.totalorder 2, %s11
      // Predicated region
      $region41: #{forward.2} parent=5 // pred_check
        %p309 = pneg %p308
      $region42: #{forward.2} parent=5 // pred_check_branch
        %311 = sbr.rel (%p309) target = $region44
      $region43: #{forward.2} parent=5 // pred_region
        %s312 = ssub.s32 %s11, 2
        // Predicated region
        $region45: #{forward.2} parent=43 // pred_check
          %p313 = pneg %p106
        $region46: #{forward.2} parent=43 // pred_check_branch
          %315 = sbr.rel (%p313) target = $region48
        $region47: #{forward.2} parent=43 // pred_region
          %p316 = scmp.lt.s32.totalorder %s22, 1
          %s317 = scalar_select %p316, %s22, 1
          %s318 = smul.addr %s317, 4
          %s319 = scalar_lea.vmem %s2, %s318
        $region48: #{forward.2} parent=43 // pred_fallthru
          _
      $region44: #{forward.2} parent=5 // pred_fallthru
        _
    $region6: #{forward.2} parent=1 // loop_footer
      %s15 = sadd.s32 1, %s11
    $region7: #{forward.2} parent=1 // loop_footer_branch
      %10 = sbr.rel target = $region3
    $region8: #{forward.2} parent=1 // loop_exit
      _
    %320 = vsyncpa [#allocation3], 1
    %s321 = scalar_lea.sflag [#allocation3], 1
    %322 = vsyncpa %s321, 1

</llo_original>
